<compile_context>
chip_gen: v7x
topology: tpu7x:2x2x1
jax: 0.10.0
libtpu: 0.0.40
codegen_flags: <defaults>
</compile_context>

<pallas_src>
import functools

import jax
import jax.numpy as jnp
import numpy as np
from jax.experimental import pallas as pl
from jax.experimental.pallas import tpu as pltpu


def _kacn_fused_kernel(x_ref, w_ref, hw_ref, g_ref, b_ref, o_ref, col_ref, *,
                       degree, kernel_size, padding, dilation, height, width,
                       eps, bn_eps):
    """Fused KACN forward, all groups at once.

    x_ref   : (Cin, M)   input, M = N*H*W on the lane axis (p = n*H*W + h*W + w)
    w_ref   : (Cout, K)  bf16 block-diagonal weight, K = k*k*(deg+1)*Cin,
                         column = (kk*(deg+1) + d)*Cin + cin
    hw_ref  : (2, M)     int32 per-lane (h, w) spatial indices
    g_ref   : (Cout, 1)  BatchNorm gamma
    b_ref   : (Cout, 1)  BatchNorm beta
    o_ref   : (Cout, M)  normalized output (lane-dense)
    col_ref : (K, M)     bf16 VMEM scratch holding the im2col block
    """
    k = kernel_size
    dm1 = degree + 1
    cin, m = x_ref.shape
    cd = dm1 * cin                                    # im2col rows per tap

    x = x_ref[...].astype(jnp.float32)
    t = jnp.clip(jnp.tanh(x), -1.0 + eps, 1.0 - eps)

    # Chebyshev basis T_d(t) == cos(d*acos(t)) via the recurrence, vectorized
    # over the whole (Cin, M) slab; rows of `feat` are ordered d*Cin + cin.
    polys = [jnp.ones_like(t), t]
    for _ in range(2, dm1):
        polys.append(2.0 * t * polys[-1] - polys[-2])
    feat = jnp.concatenate(polys[:dm1], axis=0)       # (cd, M) f32

    h_idx = hw_ref[0:1, :]                            # (1, M) int32
    w_idx = hw_ref[1:2, :]

    # Build the masked, shifted im2col block in VMEM (bf16 MXU operand).
    # Destination lane p of tap (ki, kj) reads source lane p + off; mask==1
    # implies 0 <= p + off < M and same batch, so the circular roll's wrapped
    # lanes are always zeroed.
    for ki in range(k):
        for kj in range(k):
            kk = ki * k + kj
            dh = ki * dilation - padding
            dw = kj * dilation - padding
            off = dh * width + dw
            rolled = feat if off == 0 else pltpu.roll(feat, (-off) % m, axis=1)
            valid = ((h_idx + dh >= 0) & (h_idx + dh < height) &
                     (w_idx + dw >= 0) & (w_idx + dw < width))
            tap = jnp.where(valid, rolled, 0.0)
            col_ref[kk * cd:(kk + 1) * cd, :] = tap.astype(col_ref.dtype)

    # ONE MXU matmul for the whole layer (both groups, all taps, all degrees).
    acc = jnp.dot(w_ref[...], col_ref[...], preferred_element_type=jnp.float32)

    # BatchNorm (training-mode batch statistics): each row is one output
    # channel, the lane axis is exactly the (N, H, W) reduction.  Centered
    # variance avoids E[x^2]-E[x]^2 cancellation.
    inv_m = 1.0 / m
    mean = jnp.sum(acc, axis=1, keepdims=True) * inv_m
    cent = acc - mean
    var = jnp.sum(cent * cent, axis=1, keepdims=True) * inv_m
    scale = g_ref[...] * jax.lax.rsqrt(var + bn_eps)
    o_ref[...] = (cent * scale + b_ref[...]).astype(o_ref.dtype)


def kacn_conv2d_forward(x, conv_weights, bn_gamma, bn_beta, *, degree, groups,
                        kernel_size, stride=1, padding=0, dilation=1,
                        eps=1e-07, bn_eps=1e-05):
    N, Cin, H, W = x.shape
    assert Cin % groups == 0
    Cg = Cin // groups
    dm1 = degree + 1
    k = kernel_size
    Cout_g = conv_weights[0].shape[0]
    Cout = groups * Cout_g

    Hout = (H + 2 * padding - dilation * (k - 1) - 1) // stride + 1
    Wout = (W + 2 * padding - dilation * (k - 1) - 1) // stride + 1
    assert stride == 1 and Hout == H and Wout == W, (
        "fused KACN kernel assumes stride=1 and 'same' spatial output")

    M = N * H * W
    CD = dm1 * Cin            # im2col rows per tap (degree-major, then channel)
    K = k * k * CD            # full contraction length

    # Input NCHW -> (Cin, M); flat position p = n*H*W + h*W + w on the lane axis.
    xg = x.transpose(1, 0, 2, 3).reshape(Cin, M)

    # Block-diagonal weight (Cout, K).  Torch weight for group g is
    # (Cout_g, Cg*(deg+1), k, k) with in-channel index c*(deg+1)+d; reorder to
    # column = (kk*(deg+1) + d)*Cin + (g*Cg + c), matching the im2col layout.
    wblk = jnp.zeros((Cout, k * k, dm1, Cin), jnp.float32)
    for g in range(groups):
        wg = conv_weights[g].astype(jnp.float32).reshape(Cout_g, Cg, dm1, k, k)
        wg = wg.transpose(0, 3, 4, 2, 1).reshape(Cout_g, k * k, dm1, Cg)
        wblk = wblk.at[g * Cout_g:(g + 1) * Cout_g, :, :,
                       g * Cg:(g + 1) * Cg].set(wg)
    wblk = wblk.reshape(Cout, K).astype(jnp.bfloat16)

    gamma = jnp.concatenate(
        [g_.reshape(Cout_g, 1) for g_ in bn_gamma], axis=0).astype(jnp.float32)
    beta = jnp.concatenate(
        [b_.reshape(Cout_g, 1) for b_ in bn_beta], axis=0).astype(jnp.float32)

    # Tiny per-lane (h, w) index array (int32, 8*M bytes); the 9 validity masks
    # are generated in-kernel from it with VPU compares.
    hh = np.broadcast_to(np.arange(H).reshape(1, H, 1), (N, H, W)).reshape(-1)
    ww = np.broadcast_to(np.arange(W).reshape(1, 1, W), (N, H, W)).reshape(-1)
    hw_idx = jnp.asarray(np.stack([hh, ww], axis=0).astype(np.int32))   # (2, M)

    kern = functools.partial(
        _kacn_fused_kernel, degree=degree, kernel_size=k, padding=padding,
        dilation=dilation, height=H, width=W, eps=eps, bn_eps=bn_eps)

    out = pl.pallas_call(
        kern,
        out_shape=jax.ShapeDtypeStruct((Cout, M), x.dtype),
        grid=(1,),
        in_specs=[
            pl.BlockSpec((Cin, M), lambda i: (0, 0)),
            pl.BlockSpec((Cout, K), lambda i: (0, 0)),
            pl.BlockSpec((2, M), lambda i: (0, 0)),
            pl.BlockSpec((Cout, 1), lambda i: (0, 0)),
            pl.BlockSpec((Cout, 1), lambda i: (0, 0)),
        ],
        out_specs=pl.BlockSpec((Cout, M), lambda i: (0, 0)),
        scratch_shapes=[pltpu.VMEM((K, M), jnp.bfloat16)],
    )(xg, wblk, hw_idx, gamma, beta)

    # (Cout, N*H*W) -> NCHW; simple 2-axis swap (output channel = g*Cout_g + o,
    # matching torch.cat of the per-group outputs).
    return out.reshape(Cout, N, H, W).transpose(1, 0, 2, 3)


def _reference(x, conv_weights, bn_gamma, bn_beta, *, degree, groups,
               kernel_size, stride, padding, dilation, eps=1e-07, bn_eps=1e-05):
    """Pure-JAX reference mirroring the PyTorch forward."""
    N, Cin, H, W = x.shape
    Cg = Cin // groups
    dm1 = degree + 1
    outs = []
    for g in range(groups):
        xg = x[:, g * Cg:(g + 1) * Cg]
        t = jnp.clip(jnp.tanh(xg), -1.0 + eps, 1.0 - eps)
        theta = jnp.arccos(t)[:, :, None, :, :]                    # (N, Cg, 1, H, W)
        ar = jnp.arange(dm1, dtype=x.dtype).reshape(1, 1, dm1, 1, 1)
        feat = jnp.cos(theta * ar).reshape(N, Cg * dm1, H, W)
        y = jax.lax.conv_general_dilated(
            feat, conv_weights[g], window_strides=(stride, stride),
            padding=[(padding, padding)] * 2, rhs_dilation=(dilation, dilation),
            dimension_numbers=('NCHW', 'OIHW', 'NCHW'))
        mean = jnp.mean(y, axis=(0, 2, 3), keepdims=True)
        var = jnp.var(y, axis=(0, 2, 3), keepdims=True)
        y = (y - mean) * jax.lax.rsqrt(var + bn_eps)
        y = y * bn_gamma[g].reshape(1, -1, 1, 1) + bn_beta[g].reshape(1, -1, 1, 1)
        outs.append(y)
    return jnp.concatenate(outs, axis=1)


if __name__ == "__main__":
    N, Cin, H, W = 2, 4, 16, 16
    Cout, degree, groups = 8, 3, 2
    kernel_size, stride, padding, dilation = 3, 1, 1, 1
    Cg, Cout_g = Cin // groups, Cout // groups
    Cexp = Cg * (degree + 1)

    key = jax.random.PRNGKey(0)
    kx, kw = jax.random.split(key)
    x = jax.random.normal(kx, (N, Cin, H, W), dtype=jnp.float32)

    # deterministic parameter init, matching nn.init.normal_(std = 1/(in*(deg+1)*k^ndim))
    std = 1.0 / (Cin * (degree + 1) * kernel_size ** 2)
    wkeys = jax.random.split(kw, groups)
    conv_weights = [std * jax.random.normal(
        wkeys[g], (Cout_g, Cexp, kernel_size, kernel_size), dtype=jnp.float32)
        for g in range(groups)]
    bn_gamma = [jnp.ones((Cout_g,), jnp.float32) for _ in range(groups)]
    bn_beta = [jnp.zeros((Cout_g,), jnp.float32) for _ in range(groups)]

    y = kacn_conv2d_forward(x, conv_weights, bn_gamma, bn_beta, degree=degree,
                            groups=groups, kernel_size=kernel_size, stride=stride,
                            padding=padding, dilation=dilation)
    y = jax.block_until_ready(y)
    assert y.shape == (N, Cout, H, W), y.shape

    y_ref = _reference(x, conv_weights, bn_gamma, bn_beta, degree=degree,
                       groups=groups, kernel_size=kernel_size, stride=stride,
                       padding=padding, dilation=dilation)
    np.testing.assert_allclose(np.asarray(y), np.asarray(y_ref), rtol=5e-2, atol=5e-2)
    print("KERNEL_OK")
</pallas_src>

<mosaic_0001>
module attributes {stable_mosaic.version = 11 : i64} {
  func.func @_kacn_fused_kernel(%arg0: i32, %arg1: memref<4x512xf32, #tpu.memory_space<vmem>>, %arg2: memref<8x144xbf16, #tpu.memory_space<vmem>>, %arg3: memref<2x512xi32, #tpu.memory_space<vmem>>, %arg4: memref<8x1xf32, #tpu.memory_space<vmem>>, %arg5: memref<8x1xf32, #tpu.memory_space<vmem>>, %arg6: memref<8x512xf32, #tpu.memory_space<vmem>>, %arg7: memref<144x512xbf16, #tpu.memory_space<vmem>>) attributes {dimension_semantics = [#tpu.dimension_semantics<arbitrary>], iteration_bounds = array<i64: 1>, scalar_prefetch = 0 : i64, scratch_operands = 1 : i64, tpu.core_type = #tpu.core_type<tc>, window_params = [{pipeline_mode = #tpu.pipeline_mode<synchronous>, transform_indices = @transform_0, window_bounds = array<i64: 4, 512>}, {pipeline_mode = #tpu.pipeline_mode<synchronous>, transform_indices = @transform_1, window_bounds = array<i64: 8, 144>}, {pipeline_mode = #tpu.pipeline_mode<synchronous>, transform_indices = @transform_2, window_bounds = array<i64: 2, 512>}, {pipeline_mode = #tpu.pipeline_mode<synchronous>, transform_indices = @transform_3, window_bounds = array<i64: 8, 1>}, {pipeline_mode = #tpu.pipeline_mode<synchronous>, transform_indices = @transform_4, window_bounds = array<i64: 8, 1>}, {pipeline_mode = #tpu.pipeline_mode<synchronous>, transform_indices = @transform_5, window_bounds = array<i64: 8, 512>}]} {
    %c0 = arith.constant 0 : index
    %c0_0 = arith.constant 0 : index
    %0 = vector.load %arg1[%c0, %c0_0] : memref<4x512xf32, #tpu.memory_space<vmem>>, vector<4x512xf32>
    %1 = math.tanh %0 : vector<4x512xf32>
    %cst = arith.constant -0.99999988 : f32
    %cst_1 = arith.constant 0.99999988 : f32
    %2 = vector.broadcast %cst : f32 to vector<4x512xf32>
    %3 = arith.maximumf %2, %1 : vector<4x512xf32>
    %4 = vector.broadcast %cst_1 : f32 to vector<4x512xf32>
    %5 = arith.minimumf %4, %3 : vector<4x512xf32>
    %cst_2 = arith.constant 1.000000e+00 : f32
    %6 = vector.broadcast %cst_2 : f32 to vector<4x512xf32>
    %cst_3 = arith.constant 2.000000e+00 : f32
    %7 = vector.broadcast %cst_3 : f32 to vector<4x512xf32>
    %8 = arith.mulf %7, %5 : vector<4x512xf32>
    %9 = arith.mulf %8, %5 : vector<4x512xf32>
    %10 = arith.subf %9, %6 : vector<4x512xf32>
    %cst_4 = arith.constant 2.000000e+00 : f32
    %11 = vector.broadcast %cst_4 : f32 to vector<4x512xf32>
    %12 = arith.mulf %11, %5 : vector<4x512xf32>
    %13 = arith.mulf %12, %10 : vector<4x512xf32>
    %14 = arith.subf %13, %5 : vector<4x512xf32>
    %15 = tpu.concatenate %6, %5, %10, %14 in 0 : vector<4x512xf32>, vector<4x512xf32>, vector<4x512xf32>, vector<4x512xf32> -> vector<16x512xf32>
    %c0_5 = arith.constant 0 : index
    %c0_6 = arith.constant 0 : index
    %16 = vector.load %arg3[%c0_5, %c0_6] : memref<2x512xi32, #tpu.memory_space<vmem>>, vector<1x512xi32>
    %c1 = arith.constant 1 : index
    %c0_7 = arith.constant 0 : index
    %17 = vector.load %arg3[%c1, %c0_7] : memref<2x512xi32, #tpu.memory_space<vmem>>, vector<1x512xi32>
    %c17_i32 = arith.constant 17 : i32
    %18 = tpu.dynamic_rotate %15 by %c17_i32 dim 1 : vector<16x512xf32>, i32 -> vector<16x512xf32>
    %c-1_i32 = arith.constant -1 : i32
    %19 = vector.broadcast %c-1_i32 : i32 to vector<1x512xi32>
    %20 = arith.addi %16, %19 : vector<1x512xi32>
    %c0_i32 = arith.constant 0 : i32
    %21 = vector.broadcast %c0_i32 : i32 to vector<1x512xi32>
    %22 = arith.cmpi sge, %20, %21 : vector<1x512xi32>
    %c-1_i32_8 = arith.constant -1 : i32
    %23 = vector.broadcast %c-1_i32_8 : i32 to vector<1x512xi32>
    %24 = arith.addi %16, %23 : vector<1x512xi32>
    %c16_i32 = arith.constant 16 : i32
    %25 = vector.broadcast %c16_i32 : i32 to vector<1x512xi32>
    %26 = arith.cmpi slt, %24, %25 : vector<1x512xi32>
    %27 = arith.andi %22, %26 : vector<1x512xi1>
    %c-1_i32_9 = arith.constant -1 : i32
    %28 = vector.broadcast %c-1_i32_9 : i32 to vector<1x512xi32>
    %29 = arith.addi %17, %28 : vector<1x512xi32>
    %c0_i32_10 = arith.constant 0 : i32
    %30 = vector.broadcast %c0_i32_10 : i32 to vector<1x512xi32>
    %31 = arith.cmpi sge, %29, %30 : vector<1x512xi32>
    %32 = arith.andi %27, %31 : vector<1x512xi1>
    %c-1_i32_11 = arith.constant -1 : i32
    %33 = vector.broadcast %c-1_i32_11 : i32 to vector<1x512xi32>
    %34 = arith.addi %17, %33 : vector<1x512xi32>
    %c16_i32_12 = arith.constant 16 : i32
    %35 = vector.broadcast %c16_i32_12 : i32 to vector<1x512xi32>
    %36 = arith.cmpi slt, %34, %35 : vector<1x512xi32>
    %37 = arith.andi %32, %36 : vector<1x512xi1>
    %cst_13 = arith.constant 0.000000e+00 : f32
    %38 = vector.shape_cast %37 : vector<1x512xi1> to vector<1x512xi1>
    %39 = vector.broadcast %38 : vector<1x512xi1> to vector<16x512xi1>
    %40 = vector.broadcast %cst_13 : f32 to vector<16x512xf32>
    %41 = arith.select %39, %18, %40 : vector<16x512xi1>, vector<16x512xf32>
    %42 = arith.truncf %41 : vector<16x512xf32> to vector<16x512xbf16>
    %c0_14 = arith.constant 0 : index
    %c0_15 = arith.constant 0 : index
    %43 = vector.load %arg7[%c0_14, %c0_15] : memref<144x512xbf16, #tpu.memory_space<vmem>>, vector<16x512xbf16>
    tpu.vector_store %arg7[%c0_14, %c0_15], %42 {strides = array<i32>} : memref<144x512xbf16, #tpu.memory_space<vmem>>, vector<16x512xbf16>,
    %c16_i32_16 = arith.constant 16 : i32
    %44 = tpu.dynamic_rotate %15 by %c16_i32_16 dim 1 : vector<16x512xf32>, i32 -> vector<16x512xf32>
    %c-1_i32_17 = arith.constant -1 : i32
    %45 = vector.broadcast %c-1_i32_17 : i32 to vector<1x512xi32>
    %46 = arith.addi %16, %45 : vector<1x512xi32>
    %c0_i32_18 = arith.constant 0 : i32
    %47 = vector.broadcast %c0_i32_18 : i32 to vector<1x512xi32>
    %48 = arith.cmpi sge, %46, %47 : vector<1x512xi32>
    %c-1_i32_19 = arith.constant -1 : i32
    %49 = vector.broadcast %c-1_i32_19 : i32 to vector<1x512xi32>
    %50 = arith.addi %16, %49 : vector<1x512xi32>
    %c16_i32_20 = arith.constant 16 : i32
    %51 = vector.broadcast %c16_i32_20 : i32 to vector<1x512xi32>
    %52 = arith.cmpi slt, %50, %51 : vector<1x512xi32>
    %53 = arith.andi %48, %52 : vector<1x512xi1>
    %c0_i32_21 = arith.constant 0 : i32
    %54 = vector.broadcast %c0_i32_21 : i32 to vector<1x512xi32>
    %55 = arith.addi %17, %54 : vector<1x512xi32>
    %c0_i32_22 = arith.constant 0 : i32
    %56 = vector.broadcast %c0_i32_22 : i32 to vector<1x512xi32>
    %57 = arith.cmpi sge, %55, %56 : vector<1x512xi32>
    %58 = arith.andi %53, %57 : vector<1x512xi1>
    %c0_i32_23 = arith.constant 0 : i32
    %59 = vector.broadcast %c0_i32_23 : i32 to vector<1x512xi32>
    %60 = arith.addi %17, %59 : vector<1x512xi32>
    %c16_i32_24 = arith.constant 16 : i32
    %61 = vector.broadcast %c16_i32_24 : i32 to vector<1x512xi32>
    %62 = arith.cmpi slt, %60, %61 : vector<1x512xi32>
    %63 = arith.andi %58, %62 : vector<1x512xi1>
    %cst_25 = arith.constant 0.000000e+00 : f32
    %64 = vector.shape_cast %63 : vector<1x512xi1> to vector<1x512xi1>
    %65 = vector.broadcast %64 : vector<1x512xi1> to vector<16x512xi1>
    %66 = vector.broadcast %cst_25 : f32 to vector<16x512xf32>
    %67 = arith.select %65, %44, %66 : vector<16x512xi1>, vector<16x512xf32>
    %68 = arith.truncf %67 : vector<16x512xf32> to vector<16x512xbf16>
    %c16 = arith.constant 16 : index
    %c0_26 = arith.constant 0 : index
    %69 = vector.load %arg7[%c16, %c0_26] : memref<144x512xbf16, #tpu.memory_space<vmem>>, vector<16x512xbf16>
    tpu.vector_store %arg7[%c16, %c0_26], %68 {strides = array<i32>} : memref<144x512xbf16, #tpu.memory_space<vmem>>, vector<16x512xbf16>,
    %c15_i32 = arith.constant 15 : i32
    %70 = tpu.dynamic_rotate %15 by %c15_i32 dim 1 : vector<16x512xf32>, i32 -> vector<16x512xf32>
    %c-1_i32_27 = arith.constant -1 : i32
    %71 = vector.broadcast %c-1_i32_27 : i32 to vector<1x512xi32>
    %72 = arith.addi %16, %71 : vector<1x512xi32>
    %c0_i32_28 = arith.constant 0 : i32
    %73 = vector.broadcast %c0_i32_28 : i32 to vector<1x512xi32>
    %74 = arith.cmpi sge, %72, %73 : vector<1x512xi32>
    %c-1_i32_29 = arith.constant -1 : i32
    %75 = vector.broadcast %c-1_i32_29 : i32 to vector<1x512xi32>
    %76 = arith.addi %16, %75 : vector<1x512xi32>
    %c16_i32_30 = arith.constant 16 : i32
    %77 = vector.broadcast %c16_i32_30 : i32 to vector<1x512xi32>
    %78 = arith.cmpi slt, %76, %77 : vector<1x512xi32>
    %79 = arith.andi %74, %78 : vector<1x512xi1>
    %c1_i32 = arith.constant 1 : i32
    %80 = vector.broadcast %c1_i32 : i32 to vector<1x512xi32>
    %81 = arith.addi %17, %80 : vector<1x512xi32>
    %c0_i32_31 = arith.constant 0 : i32
    %82 = vector.broadcast %c0_i32_31 : i32 to vector<1x512xi32>
    %83 = arith.cmpi sge, %81, %82 : vector<1x512xi32>
    %84 = arith.andi %79, %83 : vector<1x512xi1>
    %c1_i32_32 = arith.constant 1 : i32
    %85 = vector.broadcast %c1_i32_32 : i32 to vector<1x512xi32>
    %86 = arith.addi %17, %85 : vector<1x512xi32>
    %c16_i32_33 = arith.constant 16 : i32
    %87 = vector.broadcast %c16_i32_33 : i32 to vector<1x512xi32>
    %88 = arith.cmpi slt, %86, %87 : vector<1x512xi32>
    %89 = arith.andi %84, %88 : vector<1x512xi1>
    %cst_34 = arith.constant 0.000000e+00 : f32
    %90 = vector.shape_cast %89 : vector<1x512xi1> to vector<1x512xi1>
    %91 = vector.broadcast %90 : vector<1x512xi1> to vector<16x512xi1>
    %92 = vector.broadcast %cst_34 : f32 to vector<16x512xf32>
    %93 = arith.select %91, %70, %92 : vector<16x512xi1>, vector<16x512xf32>
    %94 = arith.truncf %93 : vector<16x512xf32> to vector<16x512xbf16>
    %c32 = arith.constant 32 : index
    %c0_35 = arith.constant 0 : index
    %95 = vector.load %arg7[%c32, %c0_35] : memref<144x512xbf16, #tpu.memory_space<vmem>>, vector<16x512xbf16>
    tpu.vector_store %arg7[%c32, %c0_35], %94 {strides = array<i32>} : memref<144x512xbf16, #tpu.memory_space<vmem>>, vector<16x512xbf16>,
    %c1_i32_36 = arith.constant 1 : i32
    %96 = tpu.dynamic_rotate %15 by %c1_i32_36 dim 1 : vector<16x512xf32>, i32 -> vector<16x512xf32>
    %c0_i32_37 = arith.constant 0 : i32
    %97 = vector.broadcast %c0_i32_37 : i32 to vector<1x512xi32>
    %98 = arith.addi %16, %97 : vector<1x512xi32>
    %c0_i32_38 = arith.constant 0 : i32
    %99 = vector.broadcast %c0_i32_38 : i32 to vector<1x512xi32>
    %100 = arith.cmpi sge, %98, %99 : vector<1x512xi32>
    %c0_i32_39 = arith.constant 0 : i32
    %101 = vector.broadcast %c0_i32_39 : i32 to vector<1x512xi32>
    %102 = arith.addi %16, %101 : vector<1x512xi32>
    %c16_i32_40 = arith.constant 16 : i32
    %103 = vector.broadcast %c16_i32_40 : i32 to vector<1x512xi32>
    %104 = arith.cmpi slt, %102, %103 : vector<1x512xi32>
    %105 = arith.andi %100, %104 : vector<1x512xi1>
    %c-1_i32_41 = arith.constant -1 : i32
    %106 = vector.broadcast %c-1_i32_41 : i32 to vector<1x512xi32>
    %107 = arith.addi %17, %106 : vector<1x512xi32>
    %c0_i32_42 = arith.constant 0 : i32
    %108 = vector.broadcast %c0_i32_42 : i32 to vector<1x512xi32>
    %109 = arith.cmpi sge, %107, %108 : vector<1x512xi32>
    %110 = arith.andi %105, %109 : vector<1x512xi1>
    %c-1_i32_43 = arith.constant -1 : i32
    %111 = vector.broadcast %c-1_i32_43 : i32 to vector<1x512xi32>
    %112 = arith.addi %17, %111 : vector<1x512xi32>
    %c16_i32_44 = arith.constant 16 : i32
    %113 = vector.broadcast %c16_i32_44 : i32 to vector<1x512xi32>
    %114 = arith.cmpi slt, %112, %113 : vector<1x512xi32>
    %115 = arith.andi %110, %114 : vector<1x512xi1>
    %cst_45 = arith.constant 0.000000e+00 : f32
    %116 = vector.shape_cast %115 : vector<1x512xi1> to vector<1x512xi1>
    %117 = vector.broadcast %116 : vector<1x512xi1> to vector<16x512xi1>
    %118 = vector.broadcast %cst_45 : f32 to vector<16x512xf32>
    %119 = arith.select %117, %96, %118 : vector<16x512xi1>, vector<16x512xf32>
    %120 = arith.truncf %119 : vector<16x512xf32> to vector<16x512xbf16>
    %c48 = arith.constant 48 : index
    %c0_46 = arith.constant 0 : index
    %121 = vector.load %arg7[%c48, %c0_46] : memref<144x512xbf16, #tpu.memory_space<vmem>>, vector<16x512xbf16>
    tpu.vector_store %arg7[%c48, %c0_46], %120 {strides = array<i32>} : memref<144x512xbf16, #tpu.memory_space<vmem>>, vector<16x512xbf16>,
    %c0_i32_47 = arith.constant 0 : i32
    %122 = vector.broadcast %c0_i32_47 : i32 to vector<1x512xi32>
    %123 = arith.addi %16, %122 : vector<1x512xi32>
    %c0_i32_48 = arith.constant 0 : i32
    %124 = vector.broadcast %c0_i32_48 : i32 to vector<1x512xi32>
    %125 = arith.cmpi sge, %123, %124 : vector<1x512xi32>
    %c0_i32_49 = arith.constant 0 : i32
    %126 = vector.broadcast %c0_i32_49 : i32 to vector<1x512xi32>
    %127 = arith.addi %16, %126 : vector<1x512xi32>
    %c16_i32_50 = arith.constant 16 : i32
    %128 = vector.broadcast %c16_i32_50 : i32 to vector<1x512xi32>
    %129 = arith.cmpi slt, %127, %128 : vector<1x512xi32>
    %130 = arith.andi %125, %129 : vector<1x512xi1>
    %c0_i32_51 = arith.constant 0 : i32
    %131 = vector.broadcast %c0_i32_51 : i32 to vector<1x512xi32>
    %132 = arith.addi %17, %131 : vector<1x512xi32>
    %c0_i32_52 = arith.constant 0 : i32
    %133 = vector.broadcast %c0_i32_52 : i32 to vector<1x512xi32>
    %134 = arith.cmpi sge, %132, %133 : vector<1x512xi32>
    %135 = arith.andi %130, %134 : vector<1x512xi1>
    %c0_i32_53 = arith.constant 0 : i32
    %136 = vector.broadcast %c0_i32_53 : i32 to vector<1x512xi32>
    %137 = arith.addi %17, %136 : vector<1x512xi32>
    %c16_i32_54 = arith.constant 16 : i32
    %138 = vector.broadcast %c16_i32_54 : i32 to vector<1x512xi32>
    %139 = arith.cmpi slt, %137, %138 : vector<1x512xi32>
    %140 = arith.andi %135, %139 : vector<1x512xi1>
    %cst_55 = arith.constant 0.000000e+00 : f32
    %141 = vector.shape_cast %140 : vector<1x512xi1> to vector<1x512xi1>
    %142 = vector.broadcast %141 : vector<1x512xi1> to vector<16x512xi1>
    %143 = vector.broadcast %cst_55 : f32 to vector<16x512xf32>
    %144 = arith.select %142, %15, %143 : vector<16x512xi1>, vector<16x512xf32>
    %145 = arith.truncf %144 : vector<16x512xf32> to vector<16x512xbf16>
    %c64 = arith.constant 64 : index
    %c0_56 = arith.constant 0 : index
    %146 = vector.load %arg7[%c64, %c0_56] : memref<144x512xbf16, #tpu.memory_space<vmem>>, vector<16x512xbf16>
    tpu.vector_store %arg7[%c64, %c0_56], %145 {strides = array<i32>} : memref<144x512xbf16, #tpu.memory_space<vmem>>, vector<16x512xbf16>,
    %c511_i32 = arith.constant 511 : i32
    %147 = tpu.dynamic_rotate %15 by %c511_i32 dim 1 : vector<16x512xf32>, i32 -> vector<16x512xf32>
    %c0_i32_57 = arith.constant 0 : i32
    %148 = vector.broadcast %c0_i32_57 : i32 to vector<1x512xi32>
    %149 = arith.addi %16, %148 : vector<1x512xi32>
    %c0_i32_58 = arith.constant 0 : i32
    %150 = vector.broadcast %c0_i32_58 : i32 to vector<1x512xi32>
    %151 = arith.cmpi sge, %149, %150 : vector<1x512xi32>
    %c0_i32_59 = arith.constant 0 : i32
    %152 = vector.broadcast %c0_i32_59 : i32 to vector<1x512xi32>
    %153 = arith.addi %16, %152 : vector<1x512xi32>
    %c16_i32_60 = arith.constant 16 : i32
    %154 = vector.broadcast %c16_i32_60 : i32 to vector<1x512xi32>
    %155 = arith.cmpi slt, %153, %154 : vector<1x512xi32>
    %156 = arith.andi %151, %155 : vector<1x512xi1>
    %c1_i32_61 = arith.constant 1 : i32
    %157 = vector.broadcast %c1_i32_61 : i32 to vector<1x512xi32>
    %158 = arith.addi %17, %157 : vector<1x512xi32>
    %c0_i32_62 = arith.constant 0 : i32
    %159 = vector.broadcast %c0_i32_62 : i32 to vector<1x512xi32>
    %160 = arith.cmpi sge, %158, %159 : vector<1x512xi32>
    %161 = arith.andi %156, %160 : vector<1x512xi1>
    %c1_i32_63 = arith.constant 1 : i32
    %162 = vector.broadcast %c1_i32_63 : i32 to vector<1x512xi32>
    %163 = arith.addi %17, %162 : vector<1x512xi32>
    %c16_i32_64 = arith.constant 16 : i32
    %164 = vector.broadcast %c16_i32_64 : i32 to vector<1x512xi32>
    %165 = arith.cmpi slt, %163, %164 : vector<1x512xi32>
    %166 = arith.andi %161, %165 : vector<1x512xi1>
    %cst_65 = arith.constant 0.000000e+00 : f32
    %167 = vector.shape_cast %166 : vector<1x512xi1> to vector<1x512xi1>
    %168 = vector.broadcast %167 : vector<1x512xi1> to vector<16x512xi1>
    %169 = vector.broadcast %cst_65 : f32 to vector<16x512xf32>
    %170 = arith.select %168, %147, %169 : vector<16x512xi1>, vector<16x512xf32>
    %171 = arith.truncf %170 : vector<16x512xf32> to vector<16x512xbf16>
    %c80 = arith.constant 80 : index
    %c0_66 = arith.constant 0 : index
    %172 = vector.load %arg7[%c80, %c0_66] : memref<144x512xbf16, #tpu.memory_space<vmem>>, vector<16x512xbf16>
    tpu.vector_store %arg7[%c80, %c0_66], %171 {strides = array<i32>} : memref<144x512xbf16, #tpu.memory_space<vmem>>, vector<16x512xbf16>,
    %c497_i32 = arith.constant 497 : i32
    %173 = tpu.dynamic_rotate %15 by %c497_i32 dim 1 : vector<16x512xf32>, i32 -> vector<16x512xf32>
    %c1_i32_67 = arith.constant 1 : i32
    %174 = vector.broadcast %c1_i32_67 : i32 to vector<1x512xi32>
    %175 = arith.addi %16, %174 : vector<1x512xi32>
    %c0_i32_68 = arith.constant 0 : i32
    %176 = vector.broadcast %c0_i32_68 : i32 to vector<1x512xi32>
    %177 = arith.cmpi sge, %175, %176 : vector<1x512xi32>
    %c1_i32_69 = arith.constant 1 : i32
    %178 = vector.broadcast %c1_i32_69 : i32 to vector<1x512xi32>
    %179 = arith.addi %16, %178 : vector<1x512xi32>
    %c16_i32_70 = arith.constant 16 : i32
    %180 = vector.broadcast %c16_i32_70 : i32 to vector<1x512xi32>
    %181 = arith.cmpi slt, %179, %180 : vector<1x512xi32>
    %182 = arith.andi %177, %181 : vector<1x512xi1>
    %c-1_i32_71 = arith.constant -1 : i32
    %183 = vector.broadcast %c-1_i32_71 : i32 to vector<1x512xi32>
    %184 = arith.addi %17, %183 : vector<1x512xi32>
    %c0_i32_72 = arith.constant 0 : i32
    %185 = vector.broadcast %c0_i32_72 : i32 to vector<1x512xi32>
    %186 = arith.cmpi sge, %184, %185 : vector<1x512xi32>
    %187 = arith.andi %182, %186 : vector<1x512xi1>
    %c-1_i32_73 = arith.constant -1 : i32
    %188 = vector.broadcast %c-1_i32_73 : i32 to vector<1x512xi32>
    %189 = arith.addi %17, %188 : vector<1x512xi32>
    %c16_i32_74 = arith.constant 16 : i32
    %190 = vector.broadcast %c16_i32_74 : i32 to vector<1x512xi32>
    %191 = arith.cmpi slt, %189, %190 : vector<1x512xi32>
    %192 = arith.andi %187, %191 : vector<1x512xi1>
    %cst_75 = arith.constant 0.000000e+00 : f32
    %193 = vector.shape_cast %192 : vector<1x512xi1> to vector<1x512xi1>
    %194 = vector.broadcast %193 : vector<1x512xi1> to vector<16x512xi1>
    %195 = vector.broadcast %cst_75 : f32 to vector<16x512xf32>
    %196 = arith.select %194, %173, %195 : vector<16x512xi1>, vector<16x512xf32>
    %197 = arith.truncf %196 : vector<16x512xf32> to vector<16x512xbf16>
    %c96 = arith.constant 96 : index
    %c0_76 = arith.constant 0 : index
    %198 = vector.load %arg7[%c96, %c0_76] : memref<144x512xbf16, #tpu.memory_space<vmem>>, vector<16x512xbf16>
    tpu.vector_store %arg7[%c96, %c0_76], %197 {strides = array<i32>} : memref<144x512xbf16, #tpu.memory_space<vmem>>, vector<16x512xbf16>,
    %c496_i32 = arith.constant 496 : i32
    %199 = tpu.dynamic_rotate %15 by %c496_i32 dim 1 : vector<16x512xf32>, i32 -> vector<16x512xf32>
    %c1_i32_77 = arith.constant 1 : i32
    %200 = vector.broadcast %c1_i32_77 : i32 to vector<1x512xi32>
    %201 = arith.addi %16, %200 : vector<1x512xi32>
    %c0_i32_78 = arith.constant 0 : i32
    %202 = vector.broadcast %c0_i32_78 : i32 to vector<1x512xi32>
    %203 = arith.cmpi sge, %201, %202 : vector<1x512xi32>
    %c1_i32_79 = arith.constant 1 : i32
    %204 = vector.broadcast %c1_i32_79 : i32 to vector<1x512xi32>
    %205 = arith.addi %16, %204 : vector<1x512xi32>
    %c16_i32_80 = arith.constant 16 : i32
    %206 = vector.broadcast %c16_i32_80 : i32 to vector<1x512xi32>
    %207 = arith.cmpi slt, %205, %206 : vector<1x512xi32>
    %208 = arith.andi %203, %207 : vector<1x512xi1>
    %c0_i32_81 = arith.constant 0 : i32
    %209 = vector.broadcast %c0_i32_81 : i32 to vector<1x512xi32>
    %210 = arith.addi %17, %209 : vector<1x512xi32>
    %c0_i32_82 = arith.constant 0 : i32
    %211 = vector.broadcast %c0_i32_82 : i32 to vector<1x512xi32>
    %212 = arith.cmpi sge, %210, %211 : vector<1x512xi32>
    %213 = arith.andi %208, %212 : vector<1x512xi1>
    %c0_i32_83 = arith.constant 0 : i32
    %214 = vector.broadcast %c0_i32_83 : i32 to vector<1x512xi32>
    %215 = arith.addi %17, %214 : vector<1x512xi32>
    %c16_i32_84 = arith.constant 16 : i32
    %216 = vector.broadcast %c16_i32_84 : i32 to vector<1x512xi32>
    %217 = arith.cmpi slt, %215, %216 : vector<1x512xi32>
    %218 = arith.andi %213, %217 : vector<1x512xi1>
    %cst_85 = arith.constant 0.000000e+00 : f32
    %219 = vector.shape_cast %218 : vector<1x512xi1> to vector<1x512xi1>
    %220 = vector.broadcast %219 : vector<1x512xi1> to vector<16x512xi1>
    %221 = vector.broadcast %cst_85 : f32 to vector<16x512xf32>
    %222 = arith.select %220, %199, %221 : vector<16x512xi1>, vector<16x512xf32>
    %223 = arith.truncf %222 : vector<16x512xf32> to vector<16x512xbf16>
    %c112 = arith.constant 112 : index
    %c0_86 = arith.constant 0 : index
    %224 = vector.load %arg7[%c112, %c0_86] : memref<144x512xbf16, #tpu.memory_space<vmem>>, vector<16x512xbf16>
    tpu.vector_store %arg7[%c112, %c0_86], %223 {strides = array<i32>} : memref<144x512xbf16, #tpu.memory_space<vmem>>, vector<16x512xbf16>,
    %c495_i32 = arith.constant 495 : i32
    %225 = tpu.dynamic_rotate %15 by %c495_i32 dim 1 : vector<16x512xf32>, i32 -> vector<16x512xf32>
    %c1_i32_87 = arith.constant 1 : i32
    %226 = vector.broadcast %c1_i32_87 : i32 to vector<1x512xi32>
    %227 = arith.addi %16, %226 : vector<1x512xi32>
    %c0_i32_88 = arith.constant 0 : i32
    %228 = vector.broadcast %c0_i32_88 : i32 to vector<1x512xi32>
    %229 = arith.cmpi sge, %227, %228 : vector<1x512xi32>
    %c1_i32_89 = arith.constant 1 : i32
    %230 = vector.broadcast %c1_i32_89 : i32 to vector<1x512xi32>
    %231 = arith.addi %16, %230 : vector<1x512xi32>
    %c16_i32_90 = arith.constant 16 : i32
    %232 = vector.broadcast %c16_i32_90 : i32 to vector<1x512xi32>
    %233 = arith.cmpi slt, %231, %232 : vector<1x512xi32>
    %234 = arith.andi %229, %233 : vector<1x512xi1>
    %c1_i32_91 = arith.constant 1 : i32
    %235 = vector.broadcast %c1_i32_91 : i32 to vector<1x512xi32>
    %236 = arith.addi %17, %235 : vector<1x512xi32>
    %c0_i32_92 = arith.constant 0 : i32
    %237 = vector.broadcast %c0_i32_92 : i32 to vector<1x512xi32>
    %238 = arith.cmpi sge, %236, %237 : vector<1x512xi32>
    %239 = arith.andi %234, %238 : vector<1x512xi1>
    %c1_i32_93 = arith.constant 1 : i32
    %240 = vector.broadcast %c1_i32_93 : i32 to vector<1x512xi32>
    %241 = arith.addi %17, %240 : vector<1x512xi32>
    %c16_i32_94 = arith.constant 16 : i32
    %242 = vector.broadcast %c16_i32_94 : i32 to vector<1x512xi32>
    %243 = arith.cmpi slt, %241, %242 : vector<1x512xi32>
    %244 = arith.andi %239, %243 : vector<1x512xi1>
    %cst_95 = arith.constant 0.000000e+00 : f32
    %245 = vector.shape_cast %244 : vector<1x512xi1> to vector<1x512xi1>
    %246 = vector.broadcast %245 : vector<1x512xi1> to vector<16x512xi1>
    %247 = vector.broadcast %cst_95 : f32 to vector<16x512xf32>
    %248 = arith.select %246, %225, %247 : vector<16x512xi1>, vector<16x512xf32>
    %249 = arith.truncf %248 : vector<16x512xf32> to vector<16x512xbf16>
    %c128 = arith.constant 128 : index
    %c0_96 = arith.constant 0 : index
    %250 = vector.load %arg7[%c128, %c0_96] : memref<144x512xbf16, #tpu.memory_space<vmem>>, vector<16x512xbf16>
    tpu.vector_store %arg7[%c128, %c0_96], %249 {strides = array<i32>} : memref<144x512xbf16, #tpu.memory_space<vmem>>, vector<16x512xbf16>,
    %c0_97 = arith.constant 0 : index
    %c0_98 = arith.constant 0 : index
    %251 = vector.load %arg2[%c0_97, %c0_98] : memref<8x144xbf16, #tpu.memory_space<vmem>>, vector<8x144xbf16>
    %c0_99 = arith.constant 0 : index
    %c0_100 = arith.constant 0 : index
    %252 = vector.load %arg7[%c0_99, %c0_100] : memref<144x512xbf16, #tpu.memory_space<vmem>>, vector<144x512xbf16>
    %cst_101 = arith.constant dense<0.000000e+00> : vector<8x512xf32>
    %253 = tpu.matmul %251, %252, %cst_101 {dimension_numbers = #tpu.dot_dimension_numbers<[1], [0], [0], [1], [0, 0, 1, 1], [], []>} : vector<8x144xbf16>, vector<144x512xbf16>, vector<8x512xf32> -> vector<8x512xf32>
    %cst_102 = arith.constant dense<0.000000e+00> : vector<8xf32>
    %254 = vector.multi_reduction <add>, %253, %cst_102 [1] : vector<8x512xf32> to vector<8xf32>
    %255 = vector.shape_cast %254 : vector<8xf32> to vector<8x1xf32>
    %cst_103 = arith.constant 0.001953125 : f32
    %256 = vector.broadcast %cst_103 : f32 to vector<8x1xf32>
    %257 = arith.mulf %255, %256 : vector<8x1xf32>
    %258 = vector.broadcast %257 : vector<8x1xf32> to vector<8x512xf32>
    %259 = arith.subf %253, %258 : vector<8x512xf32>
    %260 = arith.mulf %259, %259 : vector<8x512xf32>
    %cst_104 = arith.constant dense<0.000000e+00> : vector<8xf32>
    %261 = vector.multi_reduction <add>, %260, %cst_104 [1] : vector<8x512xf32> to vector<8xf32>
    %262 = vector.shape_cast %261 : vector<8xf32> to vector<8x1xf32>
    %cst_105 = arith.constant 0.001953125 : f32
    %263 = vector.broadcast %cst_105 : f32 to vector<8x1xf32>
    %264 = arith.mulf %262, %263 : vector<8x1xf32>
    %c0_106 = arith.constant 0 : index
    %c0_107 = arith.constant 0 : index
    %265 = vector.load %arg4[%c0_106, %c0_107] : memref<8x1xf32, #tpu.memory_space<vmem>>, vector<8x1xf32>
    %cst_108 = arith.constant 9.99999974E-6 : f32
    %266 = vector.broadcast %cst_108 : f32 to vector<8x1xf32>
    %267 = arith.addf %264, %266 : vector<8x1xf32>
    %268 = math.rsqrt %267 : vector<8x1xf32>
    %269 = arith.mulf %265, %268 : vector<8x1xf32>
    %270 = vector.broadcast %269 : vector<8x1xf32> to vector<8x512xf32>
    %271 = arith.mulf %259, %270 : vector<8x512xf32>
    %c0_109 = arith.constant 0 : index
    %c0_110 = arith.constant 0 : index
    %272 = vector.load %arg5[%c0_109, %c0_110] : memref<8x1xf32, #tpu.memory_space<vmem>>, vector<8x1xf32>
    %273 = vector.broadcast %272 : vector<8x1xf32> to vector<8x512xf32>
    %274 = arith.addf %271, %273 : vector<8x512xf32>
    %c0_111 = arith.constant 0 : index
    %c0_112 = arith.constant 0 : index
    %275 = vector.load %arg6[%c0_111, %c0_112] : memref<8x512xf32, #tpu.memory_space<vmem>>, vector<8x512xf32>
    tpu.vector_store %arg6[%c0_111, %c0_112], %274 {strides = array<i32>} : memref<8x512xf32, #tpu.memory_space<vmem>>, vector<8x512xf32>,
    return
  }
  func.func @transform_0(%arg0: i32) -> (i32, i32) {
    %c0_i32 = arith.constant 0 : i32
    %c0_i32_0 = arith.constant 0 : i32
    %c0_i32_1 = arith.constant 0 : i32
    return %c0_i32, %c0_i32_0 : i32, i32
  }
  func.func @transform_1(%arg0: i32) -> (i32, i32) {
    %c0_i32 = arith.constant 0 : i32
    %c0_i32_0 = arith.constant 0 : i32
    %c0_i32_1 = arith.constant 0 : i32
    return %c0_i32, %c0_i32_0 : i32, i32
  }
  func.func @transform_2(%arg0: i32) -> (i32, i32) {
    %c0_i32 = arith.constant 0 : i32
    %c0_i32_0 = arith.constant 0 : i32
    %c0_i32_1 = arith.constant 0 : i32
    return %c0_i32, %c0_i32_0 : i32, i32
  }
  func.func @transform_3(%arg0: i32) -> (i32, i32) {
    %c0_i32 = arith.constant 0 : i32
    %c0_i32_0 = arith.constant 0 : i32
    %c0_i32_1 = arith.constant 0 : i32
    return %c0_i32, %c0_i32_0 : i32, i32
  }
  func.func @transform_4(%arg0: i32) -> (i32, i32) {
    %c0_i32 = arith.constant 0 : i32
    %c0_i32_0 = arith.constant 0 : i32
    %c0_i32_1 = arith.constant 0 : i32
    return %c0_i32, %c0_i32_0 : i32, i32
  }
  func.func @transform_5(%arg0: i32) -> (i32, i32) {
    %c0_i32 = arith.constant 0 : i32
    %c0_i32_0 = arith.constant 0 : i32
    %c0_i32_1 = arith.constant 0 : i32
    return %c0_i32, %c0_i32_0 : i32, i32
  }
}

</mosaic_0001>

<llo_original>
// kernel: tpu_custom_call.1
$region0: #{tpu_custom_call.1}
  #allocation0 [shape = 'u32[]', space=smem, size = 0x4, offset = 0x4, fixed_abs, tag = 'smem constant byte address 0x4 - core index']
  #allocation1 [shape = 'u32[144,128]{1,0:T(1,128)}', space=vmem, size = 0x12000, scoped, tag = 'internal scratch']
  #allocation2 [shape = 'bf16[144,512]{1,0:T(16,128)(2,1)}', space=vmem, size = 0x24000, scoped, tag = 'scratch operand']
  %s0 = inlined_call_operand.vmem [shape: f32[4,512], index: 0, kind: input, shape index: {}]
  %s1 = inlined_call_operand.hbm [shape: bf16[8,144], index: 1, kind: input, shape index: {}]
  %s2 = inlined_call_operand.vmem [shape: s32[2,512], index: 2, kind: input, shape index: {}]
  %s3 = inlined_call_operand.vmem [shape: f32[8,1], index: 3, kind: input, shape index: {}]
  %s4 = inlined_call_operand.vmem [shape: f32[8,1], index: 4, kind: input, shape index: {}]
  %s5 = inlined_call_operand.hbm [shape: f32[8,512], index: 5, kind: output, shape index: {}]
  %s6 = sld [smem:[#allocation0]]
  $region34: #{tpu_custom_call.1} parent=0
    _
  %s8 = ssub.s32 1, %s6
  %s9 = scalar_select 0, %s8, %s6
  $region1: #{tpu_custom_call.1} parent=0
    #allocation3 [shape = 'u8[4096]{0}', space=vmem, size = 0x1000, scoped, tag = 'input window, operand 1, single buffered']
    #allocation4 [shape = 's32[1]{0}', space=sflag, size = 0x4, scoped, tag = 'scoped memory for tpu_custom_call.1']
    #allocation5 [shape = 's32[1]{0}', space=sflag, size = 0x4, scoped, tag = 'scoped memory for tpu_custom_call.1']
    #allocation6 [shape = 'u8[16384]{0}', space=vmem, size = 0x4000, scoped, tag = 'output window, operand 0, single buffered']
    %10 = vsyncpa [#allocation4], 0
    %11 = vsyncpa [#allocation5], 0
    // Predicated region
    $region2: #{tpu_custom_call.1} parent=1 // pred_check
      _
    $region3: #{tpu_custom_call.1} parent=1 // pred_check_branch
      %13 = sbr.rel (0) target = $region5
    $region4: #{tpu_custom_call.1} parent=1 // pred_region
      _
    $region5: #{tpu_custom_call.1} parent=1 // pred_fallthru
      _
    // Predicated region
    $region6: #{tpu_custom_call.1} parent=1 // pred_check
      _
    $region7: #{tpu_custom_call.1} parent=1 // pred_check_branch
      %15 = sbr.rel (0) target = $region9
    $region8: #{tpu_custom_call.1} parent=1 // pred_region
      %s17 = ssub.s32 128, 128
      %18 = vsyncadd [#allocation4], %s17
      %s20 = sshll.u32 [#allocation3], 4
      %s21 = int_to_ptr.vmem [resolvable:$true] %s20
      %23 = dma.hbm_to_vmem [thread:$0]  %s1, 128, %s21, [#allocation4]
    $region9: #{tpu_custom_call.1} parent=1 // pred_fallthru
      _
    // Predicated region
    $region10: #{tpu_custom_call.1} parent=1 // pred_check
      _
    $region11: #{tpu_custom_call.1} parent=1 // pred_check_branch
      %25 = sbr.rel (0) target = $region13
    $region12: #{tpu_custom_call.1} parent=1 // pred_region
      _
    $region13: #{tpu_custom_call.1} parent=1 // pred_fallthru
      _
    // Predicated region
    $region14: #{tpu_custom_call.1} parent=1 // pred_check
      _
    $region15: #{tpu_custom_call.1} parent=1 // pred_check_branch
      %27 = sbr.rel (0) target = $region17
    $region16: #{tpu_custom_call.1} parent=1 // pred_region
      _
    $region17: #{tpu_custom_call.1} parent=1 // pred_fallthru
      _
    // Predicated region
    $region18: #{tpu_custom_call.1} parent=1 // pred_check
      _
    $region19: #{tpu_custom_call.1} parent=1 // pred_check_branch
      %29 = sbr.rel (0) target = $region21
    $region20: #{tpu_custom_call.1} parent=1 // pred_region
      _
    $region21: #{tpu_custom_call.1} parent=1 // pred_fallthru
      _
    // Predicated region
    $region22: #{tpu_custom_call.1} parent=1 // pred_check
      _
    $region23: #{tpu_custom_call.1} parent=1 // pred_check_branch
      %31 = sbr.rel (0) target = $region25
    $region24: #{tpu_custom_call.1} parent=1 // pred_region
      %32 = dma.done [#allocation4], 128
    $region25: #{tpu_custom_call.1} parent=1 // pred_fallthru
      _
    %v34 = vld [vmem:[%s0] sm:$0xff]
    %v35 = vld [vmem:[%s0 + $0x8] sm:$0xff]
    %v36 = vtanh.pop %v34
    %v37 = vtanh.pop %v35
    %v38 = vmax.f32 %v36, -0.9999999
    %v39 = vmax.f32 %v37, -0.9999999
    %v40 = vmin.f32 %v38, 0.9999999
    %v41 = vmin.f32 %v39, 0.9999999
    %v42 = vmul.f32 %v40, 2.0
    %v43 = vmul.f32 %v41, 2.0
    %v44 = vmul.f32 %v42, %v40
    %v45 = vmul.f32 %v43, %v41
    %v46 = vsub.f32 %v44, 1.0
    %v47 = vsub.f32 %v45, 1.0
    %v48 = vmul.f32 %v42, %v46
    %v49 = vmul.f32 %v43, %v47
    %v50 = vsub.f32 %v48, %v40
    %v51 = vsub.f32 %v49, %v41
    %v54 = vcombine.low %v40, %v40
    %v55 = vcombine.low %v41, %v41
    %v60 = vcombine.high %v46, %v46
    %v61 = vcombine.high %v47, %v47
    %v66 = vcombine.low %v50, %v50
    %v67 = vcombine.low %v51, %v51
    %vm70 = vcmask 1043456
    %v71 = vsel %vm70, 1.0, %v54
    %v72 = vsel %vm70, 1.0, %v40
    %v73 = vsel %vm70, 1.0, %v55
    %v74 = vsel %vm70, 1.0, %v41
    %v75 = vsel %vm70, %v46, %v66
    %v76 = vsel %vm70, %v60, %v50
    %v77 = vsel %vm70, %v47, %v67
    %v78 = vsel %vm70, %v61, %v51
    %v79 = vld [vmem:[%s2] ss:$2 sm:$0xf]
    %s80 = scalar_lea.vmem %s2, 1
    %v81 = vld [vmem:[%s80] ss:$2 sm:$0xf]
    %82 = vrot.lane.b32.xlu0 %v71, 17
    %v83 = vpop.permute.xlu0 %82
    %84 = vrot.lane.b32.xlu0 %v75, 17
    %v85 = vpop.permute.xlu0 %84
    %86 = vrot.lane.b32.xlu0 %v72, 17
    %v87 = vpop.permute.xlu0 %86
    %88 = vrot.lane.b32.xlu0 %v76, 17
    %v89 = vpop.permute.xlu0 %88
    %90 = vrot.lane.b32.xlu0 %v73, 17
    %v91 = vpop.permute.xlu0 %90
    %92 = vrot.lane.b32.xlu0 %v77, 17
    %v93 = vpop.permute.xlu0 %92
    %94 = vrot.lane.b32.xlu0 %v74, 17
    %v95 = vpop.permute.xlu0 %94
    %96 = vrot.lane.b32.xlu0 %v78, 17
    %v97 = vpop.permute.xlu0 %96
    %v98 = vlaneseq
    %v99 = vand.u32 %v98, 127
    %vm100 = vcmp.lt.s32.totalorder %v99, 17
    %v101 = vsel %vm100, %v91, %v95
    %v102 = vsel %vm100, %v93, %v97
    %v103 = vsel %vm100, %v87, %v91
    %v104 = vsel %vm100, %v89, %v93
    %v105 = vsel %vm100, %v83, %v87
    %v106 = vsel %vm100, %v85, %v89
    %v107 = vsel %vm100, %v95, %v83
    %v108 = vsel %vm100, %v97, %v85
    %v109 = vadd.s32 %v79, 4294967295
    %vm110 = vcmp.ge.s32.totalorder %v109, 0
    %vm111 = vcmp.lt.s32.totalorder %v109, 16
    %vm112 = vmand %vm110, %vm111
    %v113 = vadd.s32 %v81, 4294967295
    %vm114 = vcmp.ge.s32.totalorder %v113, 0
    %vm115 = vmand %vm112, %vm114
    %vm116 = vcmp.lt.s32.totalorder %v113, 16
    %vm117 = vmand %vm115, %vm116
    %v118 = vsel %vm117, 1, 0
    %v119 = vlaneseq
    %v120 = vshrl.u32 %v119, 7
    %v121 = vsub.s32 0, %v120
    %v122 = vrot.slane %v118, %v121
    %v123 = vlaneseq
    %v124 = vshrl.u32 %v123, 7
    %v125 = vsub.s32 1, %v124
    %v126 = vrot.slane %v118, %v125
    %v127 = vlaneseq
    %v128 = vshrl.u32 %v127, 7
    %v129 = vsub.s32 2, %v128
    %v130 = vrot.slane %v118, %v129
    %v131 = vlaneseq
    %v132 = vshrl.u32 %v131, 7
    %v133 = vsub.s32 3, %v132
    %v134 = vrot.slane %v118, %v133
    %vm135 = vcmp.eq.s32.totalorder %v122, 1
    %vm136 = vcmp.eq.s32.totalorder %v126, 1
    %vm137 = vcmp.eq.s32.totalorder %v130, 1
    %vm138 = vcmp.eq.s32.totalorder %v134, 1
    %v139 = vsel %vm135, %v107, 0.0
    %v140 = vsel %vm136, %v105, 0.0
    %v141 = vsel %vm137, %v103, 0.0
    %v142 = vsel %vm138, %v101, 0.0
    %v143 = vsel %vm135, %v108, 0.0
    %v144 = vsel %vm136, %v106, 0.0
    %v145 = vsel %vm137, %v104, 0.0
    %v146 = vsel %vm138, %v102, 0.0
    %v147 = vpack.c.bf16 %v143, %v139
    %v148 = vpack.c.bf16 %v144, %v140
    %v149 = vpack.c.bf16 %v145, %v141
    %v150 = vpack.c.bf16 %v146, %v142
    %151 = vst [vmem:[#allocation2] sm:$0xff] %v147
    %152 = vst [vmem:[#allocation2 + $0x8] sm:$0xff] %v148
    %153 = vst [vmem:[#allocation2 + $0x10] sm:$0xff] %v149
    %154 = vst [vmem:[#allocation2 + $0x18] sm:$0xff] %v150
    %155 = vrot.lane.b32.xlu0 %v71, 16
    %v156 = vpop.permute.xlu0 %155
    %157 = vrot.lane.b32.xlu0 %v75, 16
    %v158 = vpop.permute.xlu0 %157
    %159 = vrot.lane.b32.xlu0 %v72, 16
    %v160 = vpop.permute.xlu0 %159
    %161 = vrot.lane.b32.xlu0 %v76, 16
    %v162 = vpop.permute.xlu0 %161
    %163 = vrot.lane.b32.xlu0 %v73, 16
    %v164 = vpop.permute.xlu0 %163
    %165 = vrot.lane.b32.xlu0 %v77, 16
    %v166 = vpop.permute.xlu0 %165
    %167 = vrot.lane.b32.xlu0 %v74, 16
    %v168 = vpop.permute.xlu0 %167
    %169 = vrot.lane.b32.xlu0 %v78, 16
    %v170 = vpop.permute.xlu0 %169
    %vm171 = vcmp.lt.s32.totalorder %v99, 16
    %v172 = vsel %vm171, %v164, %v168
    %v173 = vsel %vm171, %v166, %v170
    %v174 = vsel %vm171, %v160, %v164
    %v175 = vsel %vm171, %v162, %v166
    %v176 = vsel %vm171, %v156, %v160
    %v177 = vsel %vm171, %v158, %v162
    %v178 = vsel %vm171, %v168, %v156
    %v179 = vsel %vm171, %v170, %v158
    %vm180 = vcmp.ge.s32.totalorder %v81, 0
    %vm181 = vmand %vm112, %vm180
    %vm182 = vcmp.lt.s32.totalorder %v81, 16
    %vm183 = vmand %vm181, %vm182
    %v184 = vsel %vm183, 1, 0
    %v185 = vlaneseq
    %v186 = vshrl.u32 %v185, 7
    %v187 = vsub.s32 0, %v186
    %v188 = vrot.slane %v184, %v187
    %v189 = vlaneseq
    %v190 = vshrl.u32 %v189, 7
    %v191 = vsub.s32 1, %v190
    %v192 = vrot.slane %v184, %v191
    %v193 = vlaneseq
    %v194 = vshrl.u32 %v193, 7
    %v195 = vsub.s32 2, %v194
    %v196 = vrot.slane %v184, %v195
    %v197 = vlaneseq
    %v198 = vshrl.u32 %v197, 7
    %v199 = vsub.s32 3, %v198
    %v200 = vrot.slane %v184, %v199
    %vm201 = vcmp.eq.s32.totalorder %v188, 1
    %vm202 = vcmp.eq.s32.totalorder %v192, 1
    %vm203 = vcmp.eq.s32.totalorder %v196, 1
    %vm204 = vcmp.eq.s32.totalorder %v200, 1
    %v205 = vsel %vm201, %v178, 0.0
    %v206 = vsel %vm202, %v176, 0.0
    %v207 = vsel %vm203, %v174, 0.0
    %v208 = vsel %vm204, %v172, 0.0
    %v209 = vsel %vm201, %v179, 0.0
    %v210 = vsel %vm202, %v177, 0.0
    %v211 = vsel %vm203, %v175, 0.0
    %v212 = vsel %vm204, %v173, 0.0
    %v213 = vpack.c.bf16 %v209, %v205
    %v214 = vpack.c.bf16 %v210, %v206
    %v215 = vpack.c.bf16 %v211, %v207
    %v216 = vpack.c.bf16 %v212, %v208
    %217 = vst [vmem:[#allocation2 + $0x20] sm:$0xff] %v213
    %218 = vst [vmem:[#allocation2 + $0x28] sm:$0xff] %v214
    %219 = vst [vmem:[#allocation2 + $0x30] sm:$0xff] %v215
    %220 = vst [vmem:[#allocation2 + $0x38] sm:$0xff] %v216
    %221 = vrot.lane.b32.xlu0 %v71, 15
    %v222 = vpop.permute.xlu0 %221
    %223 = vrot.lane.b32.xlu0 %v75, 15
    %v224 = vpop.permute.xlu0 %223
    %225 = vrot.lane.b32.xlu0 %v72, 15
    %v226 = vpop.permute.xlu0 %225
    %227 = vrot.lane.b32.xlu0 %v76, 15
    %v228 = vpop.permute.xlu0 %227
    %229 = vrot.lane.b32.xlu0 %v73, 15
    %v230 = vpop.permute.xlu0 %229
    %231 = vrot.lane.b32.xlu0 %v77, 15
    %v232 = vpop.permute.xlu0 %231
    %233 = vrot.lane.b32.xlu0 %v74, 15
    %v234 = vpop.permute.xlu0 %233
    %235 = vrot.lane.b32.xlu0 %v78, 15
    %v236 = vpop.permute.xlu0 %235
    %vm237 = vcmp.lt.s32.totalorder %v99, 15
    %v238 = vsel %vm237, %v230, %v234
    %v239 = vsel %vm237, %v232, %v236
    %v240 = vsel %vm237, %v226, %v230
    %v241 = vsel %vm237, %v228, %v232
    %v242 = vsel %vm237, %v222, %v226
    %v243 = vsel %vm237, %v224, %v228
    %v244 = vsel %vm237, %v234, %v222
    %v245 = vsel %vm237, %v236, %v224
    %v246 = vadd.s32 %v81, 1
    %vm247 = vcmp.ge.s32.totalorder %v246, 0
    %vm248 = vmand %vm112, %vm247
    %vm249 = vcmp.lt.s32.totalorder %v246, 16
    %vm250 = vmand %vm248, %vm249
    %v251 = vsel %vm250, 1, 0
    %v252 = vlaneseq
    %v253 = vshrl.u32 %v252, 7
    %v254 = vsub.s32 0, %v253
    %v255 = vrot.slane %v251, %v254
    %v256 = vlaneseq
    %v257 = vshrl.u32 %v256, 7
    %v258 = vsub.s32 1, %v257
    %v259 = vrot.slane %v251, %v258
    %v260 = vlaneseq
    %v261 = vshrl.u32 %v260, 7
    %v262 = vsub.s32 2, %v261
    %v263 = vrot.slane %v251, %v262
    %v264 = vlaneseq
    %v265 = vshrl.u32 %v264, 7
    %v266 = vsub.s32 3, %v265
    %v267 = vrot.slane %v251, %v266
    %vm268 = vcmp.eq.s32.totalorder %v255, 1
    %vm269 = vcmp.eq.s32.totalorder %v259, 1
    %vm270 = vcmp.eq.s32.totalorder %v263, 1
    %vm271 = vcmp.eq.s32.totalorder %v267, 1
    %v272 = vsel %vm268, %v244, 0.0
    %v273 = vsel %vm269, %v242, 0.0
    %v274 = vsel %vm270, %v240, 0.0
    %v275 = vsel %vm271, %v238, 0.0
    %v276 = vsel %vm268, %v245, 0.0
    %v277 = vsel %vm269, %v243, 0.0
    %v278 = vsel %vm270, %v241, 0.0
    %v279 = vsel %vm271, %v239, 0.0
    %v280 = vpack.c.bf16 %v276, %v272
    %v281 = vpack.c.bf16 %v277, %v273
    %v282 = vpack.c.bf16 %v278, %v274
    %v283 = vpack.c.bf16 %v279, %v275
    %284 = vst [vmem:[#allocation2 + $0x40] sm:$0xff] %v280
    %285 = vst [vmem:[#allocation2 + $0x48] sm:$0xff] %v281
    %286 = vst [vmem:[#allocation2 + $0x50] sm:$0xff] %v282
    %287 = vst [vmem:[#allocation2 + $0x58] sm:$0xff] %v283
    %288 = vrot.lane.b32.xlu0 %v71, 1
    %v289 = vpop.permute.xlu0 %288
    %290 = vrot.lane.b32.xlu0 %v75, 1
    %v291 = vpop.permute.xlu0 %290
    %292 = vrot.lane.b32.xlu0 %v72, 1
    %v293 = vpop.permute.xlu0 %292
    %294 = vrot.lane.b32.xlu0 %v76, 1
    %v295 = vpop.permute.xlu0 %294
    %296 = vrot.lane.b32.xlu0 %v73, 1
    %v297 = vpop.permute.xlu0 %296
    %298 = vrot.lane.b32.xlu0 %v77, 1
    %v299 = vpop.permute.xlu0 %298
    %300 = vrot.lane.b32.xlu0 %v74, 1
    %v301 = vpop.permute.xlu0 %300
    %302 = vrot.lane.b32.xlu0 %v78, 1
    %v303 = vpop.permute.xlu0 %302
    %vm304 = vcmp.lt.s32.totalorder %v99, 1
    %v305 = vsel %vm304, %v297, %v301
    %v306 = vsel %vm304, %v299, %v303
    %v307 = vsel %vm304, %v293, %v297
    %v308 = vsel %vm304, %v295, %v299
    %v309 = vsel %vm304, %v289, %v293
    %v310 = vsel %vm304, %v291, %v295
    %v311 = vsel %vm304, %v301, %v289
    %v312 = vsel %vm304, %v303, %v291
    %vm313 = vcmp.ge.s32.totalorder %v79, 0
    %vm314 = vcmp.lt.s32.totalorder %v79, 16
    %vm315 = vmand %vm313, %vm314
    %vm316 = vmand %vm315, %vm114
    %vm317 = vmand %vm316, %vm116
    %v318 = vsel %vm317, 1, 0
    %v319 = vlaneseq
    %v320 = vshrl.u32 %v319, 7
    %v321 = vsub.s32 0, %v320
    %v322 = vrot.slane %v318, %v321
    %v323 = vlaneseq
    %v324 = vshrl.u32 %v323, 7
    %v325 = vsub.s32 1, %v324
    %v326 = vrot.slane %v318, %v325
    %v327 = vlaneseq
    %v328 = vshrl.u32 %v327, 7
    %v329 = vsub.s32 2, %v328
    %v330 = vrot.slane %v318, %v329
    %v331 = vlaneseq
    %v332 = vshrl.u32 %v331, 7
    %v333 = vsub.s32 3, %v332
    %v334 = vrot.slane %v318, %v333
    %vm335 = vcmp.eq.s32.totalorder %v322, 1
    %vm336 = vcmp.eq.s32.totalorder %v326, 1
    %vm337 = vcmp.eq.s32.totalorder %v330, 1
    %vm338 = vcmp.eq.s32.totalorder %v334, 1
    %v339 = vsel %vm335, %v311, 0.0
    %v340 = vsel %vm336, %v309, 0.0
    %v341 = vsel %vm337, %v307, 0.0
    %v342 = vsel %vm338, %v305, 0.0
    %v343 = vsel %vm335, %v312, 0.0
    %v344 = vsel %vm336, %v310, 0.0
    %v345 = vsel %vm337, %v308, 0.0
    %v346 = vsel %vm338, %v306, 0.0
    %v347 = vpack.c.bf16 %v343, %v339
    %v348 = vpack.c.bf16 %v344, %v340
    %v349 = vpack.c.bf16 %v345, %v341
    %v350 = vpack.c.bf16 %v346, %v342
    %351 = vst [vmem:[#allocation2 + $0x60] sm:$0xff] %v347
    %352 = vst [vmem:[#allocation2 + $0x68] sm:$0xff] %v348
    %353 = vst [vmem:[#allocation2 + $0x70] sm:$0xff] %v349
    %354 = vst [vmem:[#allocation2 + $0x78] sm:$0xff] %v350
    %vm355 = vmand %vm315, %vm180
    %vm356 = vmand %vm355, %vm182
    %v357 = vsel %vm356, 1, 0
    %v358 = vlaneseq
    %v359 = vshrl.u32 %v358, 7
    %v360 = vsub.s32 0, %v359
    %v361 = vrot.slane %v357, %v360
    %v362 = vlaneseq
    %v363 = vshrl.u32 %v362, 7
    %v364 = vsub.s32 1, %v363
    %v365 = vrot.slane %v357, %v364
    %v366 = vlaneseq
    %v367 = vshrl.u32 %v366, 7
    %v368 = vsub.s32 2, %v367
    %v369 = vrot.slane %v357, %v368
    %v370 = vlaneseq
    %v371 = vshrl.u32 %v370, 7
    %v372 = vsub.s32 3, %v371
    %v373 = vrot.slane %v357, %v372
    %vm374 = vcmp.eq.s32.totalorder %v361, 1
    %vm375 = vcmp.eq.s32.totalorder %v365, 1
    %vm376 = vcmp.eq.s32.totalorder %v369, 1
    %vm377 = vcmp.eq.s32.totalorder %v373, 1
    %v378 = vsel %vm374, %v71, 0.0
    %v379 = vsel %vm375, %v72, 0.0
    %v380 = vsel %vm376, %v73, 0.0
    %v381 = vsel %vm377, %v74, 0.0
    %v382 = vsel %vm374, %v75, 0.0
    %v383 = vsel %vm375, %v76, 0.0
    %v384 = vsel %vm376, %v77, 0.0
    %v385 = vsel %vm377, %v78, 0.0
    %v386 = vpack.c.bf16 %v382, %v378
    %v387 = vpack.c.bf16 %v383, %v379
    %v388 = vpack.c.bf16 %v384, %v380
    %v389 = vpack.c.bf16 %v385, %v381
    %390 = vst [vmem:[#allocation2 + $0x80] sm:$0xff] %v386
    %391 = vst [vmem:[#allocation2 + $0x88] sm:$0xff] %v387
    %392 = vst [vmem:[#allocation2 + $0x90] sm:$0xff] %v388
    %393 = vst [vmem:[#allocation2 + $0x98] sm:$0xff] %v389
    %394 = vrot.lane.b32.xlu0 %v71, 127
    %v395 = vpop.permute.xlu0 %394
    %396 = vrot.lane.b32.xlu0 %v75, 127
    %v397 = vpop.permute.xlu0 %396
    %398 = vrot.lane.b32.xlu0 %v72, 127
    %v399 = vpop.permute.xlu0 %398
    %400 = vrot.lane.b32.xlu0 %v76, 127
    %v401 = vpop.permute.xlu0 %400
    %402 = vrot.lane.b32.xlu0 %v73, 127
    %v403 = vpop.permute.xlu0 %402
    %404 = vrot.lane.b32.xlu0 %v77, 127
    %v405 = vpop.permute.xlu0 %404
    %406 = vrot.lane.b32.xlu0 %v74, 127
    %v407 = vpop.permute.xlu0 %406
    %408 = vrot.lane.b32.xlu0 %v78, 127
    %v409 = vpop.permute.xlu0 %408
    %vm410 = vcmp.lt.s32.totalorder %v99, 127
    %v411 = vsel %vm410, %v403, %v407
    %v412 = vsel %vm410, %v405, %v409
    %v413 = vsel %vm410, %v399, %v403
    %v414 = vsel %vm410, %v401, %v405
    %v415 = vsel %vm410, %v395, %v399
    %v416 = vsel %vm410, %v397, %v401
    %v417 = vsel %vm410, %v407, %v395
    %v418 = vsel %vm410, %v409, %v397
    %vm419 = vmand %vm315, %vm247
    %vm420 = vmand %vm419, %vm249
    %v421 = vsel %vm420, 1, 0
    %v422 = vlaneseq
    %v423 = vshrl.u32 %v422, 7
    %v424 = vsub.s32 0, %v423
    %v425 = vrot.slane %v421, %v424
    %v426 = vlaneseq
    %v427 = vshrl.u32 %v426, 7
    %v428 = vsub.s32 1, %v427
    %v429 = vrot.slane %v421, %v428
    %v430 = vlaneseq
    %v431 = vshrl.u32 %v430, 7
    %v432 = vsub.s32 2, %v431
    %v433 = vrot.slane %v421, %v432
    %v434 = vlaneseq
    %v435 = vshrl.u32 %v434, 7
    %v436 = vsub.s32 3, %v435
    %v437 = vrot.slane %v421, %v436
    %vm438 = vcmp.eq.s32.totalorder %v425, 1
    %vm439 = vcmp.eq.s32.totalorder %v429, 1
    %vm440 = vcmp.eq.s32.totalorder %v433, 1
    %vm441 = vcmp.eq.s32.totalorder %v437, 1
    %v442 = vsel %vm438, %v415, 0.0
    %v443 = vsel %vm439, %v413, 0.0
    %v444 = vsel %vm440, %v411, 0.0
    %v445 = vsel %vm441, %v417, 0.0
    %v446 = vsel %vm438, %v416, 0.0
    %v447 = vsel %vm439, %v414, 0.0
    %v448 = vsel %vm440, %v412, 0.0
    %v449 = vsel %vm441, %v418, 0.0
    %v450 = vpack.c.bf16 %v446, %v442
    %v451 = vpack.c.bf16 %v447, %v443
    %v452 = vpack.c.bf16 %v448, %v444
    %v453 = vpack.c.bf16 %v449, %v445
    %454 = vst [vmem:[#allocation2 + $0xa0] sm:$0xff] %v450
    %455 = vst [vmem:[#allocation2 + $0xa8] sm:$0xff] %v451
    %456 = vst [vmem:[#allocation2 + $0xb0] sm:$0xff] %v452
    %457 = vst [vmem:[#allocation2 + $0xb8] sm:$0xff] %v453
    %458 = vrot.lane.b32.xlu0 %v71, 113
    %v459 = vpop.permute.xlu0 %458
    %460 = vrot.lane.b32.xlu0 %v75, 113
    %v461 = vpop.permute.xlu0 %460
    %462 = vrot.lane.b32.xlu0 %v72, 113
    %v463 = vpop.permute.xlu0 %462
    %464 = vrot.lane.b32.xlu0 %v76, 113
    %v465 = vpop.permute.xlu0 %464
    %466 = vrot.lane.b32.xlu0 %v73, 113
    %v467 = vpop.permute.xlu0 %466
    %468 = vrot.lane.b32.xlu0 %v77, 113
    %v469 = vpop.permute.xlu0 %468
    %470 = vrot.lane.b32.xlu0 %v74, 113
    %v471 = vpop.permute.xlu0 %470
    %472 = vrot.lane.b32.xlu0 %v78, 113
    %v473 = vpop.permute.xlu0 %472
    %vm474 = vcmp.lt.s32.totalorder %v99, 113
    %v475 = vsel %vm474, %v467, %v471
    %v476 = vsel %vm474, %v469, %v473
    %v477 = vsel %vm474, %v463, %v467
    %v478 = vsel %vm474, %v465, %v469
    %v479 = vsel %vm474, %v459, %v463
    %v480 = vsel %vm474, %v461, %v465
    %v481 = vsel %vm474, %v471, %v459
    %v482 = vsel %vm474, %v473, %v461
    %v483 = vadd.s32 %v79, 1
    %vm484 = vcmp.ge.s32.totalorder %v483, 0
    %vm485 = vcmp.lt.s32.totalorder %v483, 16
    %vm486 = vmand %vm484, %vm485
    %vm487 = vmand %vm486, %vm114
    %vm488 = vmand %vm487, %vm116
    %v489 = vsel %vm488, 1, 0
    %v490 = vlaneseq
    %v491 = vshrl.u32 %v490, 7
    %v492 = vsub.s32 0, %v491
    %v493 = vrot.slane %v489, %v492
    %v494 = vlaneseq
    %v495 = vshrl.u32 %v494, 7
    %v496 = vsub.s32 1, %v495
    %v497 = vrot.slane %v489, %v496
    %v498 = vlaneseq
    %v499 = vshrl.u32 %v498, 7
    %v500 = vsub.s32 2, %v499
    %v501 = vrot.slane %v489, %v500
    %v502 = vlaneseq
    %v503 = vshrl.u32 %v502, 7
    %v504 = vsub.s32 3, %v503
    %v505 = vrot.slane %v489, %v504
    %vm506 = vcmp.eq.s32.totalorder %v493, 1
    %vm507 = vcmp.eq.s32.totalorder %v497, 1
    %vm508 = vcmp.eq.s32.totalorder %v501, 1
    %vm509 = vcmp.eq.s32.totalorder %v505, 1
    %v510 = vsel %vm506, %v479, 0.0
    %v511 = vsel %vm507, %v477, 0.0
    %v512 = vsel %vm508, %v475, 0.0
    %v513 = vsel %vm509, %v481, 0.0
    %v514 = vsel %vm506, %v480, 0.0
    %v515 = vsel %vm507, %v478, 0.0
    %v516 = vsel %vm508, %v476, 0.0
    %v517 = vsel %vm509, %v482, 0.0
    %v518 = vpack.c.bf16 %v514, %v510
    %v519 = vpack.c.bf16 %v515, %v511
    %v520 = vpack.c.bf16 %v516, %v512
    %v521 = vpack.c.bf16 %v517, %v513
    %522 = vst [vmem:[#allocation2 + $0xc0] sm:$0xff] %v518
    %523 = vst [vmem:[#allocation2 + $0xc8] sm:$0xff] %v519
    %524 = vst [vmem:[#allocation2 + $0xd0] sm:$0xff] %v520
    %525 = vst [vmem:[#allocation2 + $0xd8] sm:$0xff] %v521
    %526 = vrot.lane.b32.xlu0 %v71, 112
    %v527 = vpop.permute.xlu0 %526
    %528 = vrot.lane.b32.xlu0 %v75, 112
    %v529 = vpop.permute.xlu0 %528
    %530 = vrot.lane.b32.xlu0 %v72, 112
    %v531 = vpop.permute.xlu0 %530
    %532 = vrot.lane.b32.xlu0 %v76, 112
    %v533 = vpop.permute.xlu0 %532
    %534 = vrot.lane.b32.xlu0 %v73, 112
    %v535 = vpop.permute.xlu0 %534
    %536 = vrot.lane.b32.xlu0 %v77, 112
    %v537 = vpop.permute.xlu0 %536
    %538 = vrot.lane.b32.xlu0 %v74, 112
    %v539 = vpop.permute.xlu0 %538
    %540 = vrot.lane.b32.xlu0 %v78, 112
    %v541 = vpop.permute.xlu0 %540
    %vm542 = vcmp.lt.s32.totalorder %v99, 112
    %v543 = vsel %vm542, %v535, %v539
    %v544 = vsel %vm542, %v537, %v541
    %v545 = vsel %vm542, %v531, %v535
    %v546 = vsel %vm542, %v533, %v537
    %v547 = vsel %vm542, %v527, %v531
    %v548 = vsel %vm542, %v529, %v533
    %v549 = vsel %vm542, %v539, %v527
    %v550 = vsel %vm542, %v541, %v529
    %vm551 = vmand %vm486, %vm180
    %vm552 = vmand %vm551, %vm182
    %v553 = vsel %vm552, 1, 0
    %v554 = vlaneseq
    %v555 = vshrl.u32 %v554, 7
    %v556 = vsub.s32 0, %v555
    %v557 = vrot.slane %v553, %v556
    %v558 = vlaneseq
    %v559 = vshrl.u32 %v558, 7
    %v560 = vsub.s32 1, %v559
    %v561 = vrot.slane %v553, %v560
    %v562 = vlaneseq
    %v563 = vshrl.u32 %v562, 7
    %v564 = vsub.s32 2, %v563
    %v565 = vrot.slane %v553, %v564
    %v566 = vlaneseq
    %v567 = vshrl.u32 %v566, 7
    %v568 = vsub.s32 3, %v567
    %v569 = vrot.slane %v553, %v568
    %vm570 = vcmp.eq.s32.totalorder %v557, 1
    %vm571 = vcmp.eq.s32.totalorder %v561, 1
    %vm572 = vcmp.eq.s32.totalorder %v565, 1
    %vm573 = vcmp.eq.s32.totalorder %v569, 1
    %v574 = vsel %vm570, %v547, 0.0
    %v575 = vsel %vm571, %v545, 0.0
    %v576 = vsel %vm572, %v543, 0.0
    %v577 = vsel %vm573, %v549, 0.0
    %v578 = vsel %vm570, %v548, 0.0
    %v579 = vsel %vm571, %v546, 0.0
    %v580 = vsel %vm572, %v544, 0.0
    %v581 = vsel %vm573, %v550, 0.0
    %v582 = vpack.c.bf16 %v578, %v574
    %v583 = vpack.c.bf16 %v579, %v575
    %v584 = vpack.c.bf16 %v580, %v576
    %v585 = vpack.c.bf16 %v581, %v577
    %586 = vst [vmem:[#allocation2 + $0xe0] sm:$0xff] %v582
    %587 = vst [vmem:[#allocation2 + $0xe8] sm:$0xff] %v583
    %588 = vst [vmem:[#allocation2 + $0xf0] sm:$0xff] %v584
    %589 = vst [vmem:[#allocation2 + $0xf8] sm:$0xff] %v585
    %590 = vrot.lane.b32.xlu0 %v71, 111
    %v591 = vpop.permute.xlu0 %590
    %592 = vrot.lane.b32.xlu0 %v75, 111
    %v593 = vpop.permute.xlu0 %592
    %594 = vrot.lane.b32.xlu0 %v72, 111
    %v595 = vpop.permute.xlu0 %594
    %596 = vrot.lane.b32.xlu0 %v76, 111
    %v597 = vpop.permute.xlu0 %596
    %598 = vrot.lane.b32.xlu0 %v73, 111
    %v599 = vpop.permute.xlu0 %598
    %600 = vrot.lane.b32.xlu0 %v77, 111
    %v601 = vpop.permute.xlu0 %600
    %602 = vrot.lane.b32.xlu0 %v74, 111
    %v603 = vpop.permute.xlu0 %602
    %604 = vrot.lane.b32.xlu0 %v78, 111
    %v605 = vpop.permute.xlu0 %604
    %vm606 = vcmp.lt.s32.totalorder %v99, 111
    %v607 = vsel %vm606, %v599, %v603
    %v608 = vsel %vm606, %v601, %v605
    %v609 = vsel %vm606, %v595, %v599
    %v610 = vsel %vm606, %v597, %v601
    %v611 = vsel %vm606, %v591, %v595
    %v612 = vsel %vm606, %v593, %v597
    %v613 = vsel %vm606, %v603, %v591
    %v614 = vsel %vm606, %v605, %v593
    %vm615 = vmand %vm486, %vm247
    %vm616 = vmand %vm615, %vm249
    %v617 = vsel %vm616, 1, 0
    %v618 = vlaneseq
    %v619 = vshrl.u32 %v618, 7
    %v620 = vsub.s32 0, %v619
    %v621 = vrot.slane %v617, %v620
    %v622 = vlaneseq
    %v623 = vshrl.u32 %v622, 7
    %v624 = vsub.s32 1, %v623
    %v625 = vrot.slane %v617, %v624
    %v626 = vlaneseq
    %v627 = vshrl.u32 %v626, 7
    %v628 = vsub.s32 2, %v627
    %v629 = vrot.slane %v617, %v628
    %v630 = vlaneseq
    %v631 = vshrl.u32 %v630, 7
    %v632 = vsub.s32 3, %v631
    %v633 = vrot.slane %v617, %v632
    %vm634 = vcmp.eq.s32.totalorder %v621, 1
    %vm635 = vcmp.eq.s32.totalorder %v625, 1
    %vm636 = vcmp.eq.s32.totalorder %v629, 1
    %vm637 = vcmp.eq.s32.totalorder %v633, 1
    %v638 = vsel %vm634, %v611, 0.0
    %v639 = vsel %vm635, %v609, 0.0
    %v640 = vsel %vm636, %v607, 0.0
    %v641 = vsel %vm637, %v613, 0.0
    %v642 = vsel %vm634, %v612, 0.0
    %v643 = vsel %vm635, %v610, 0.0
    %v644 = vsel %vm636, %v608, 0.0
    %v645 = vsel %vm637, %v614, 0.0
    %v646 = vpack.c.bf16 %v642, %v638
    %v647 = vpack.c.bf16 %v643, %v639
    %v648 = vpack.c.bf16 %v644, %v640
    %v649 = vpack.c.bf16 %v645, %v641
    %650 = vst [vmem:[#allocation2 + $0x100] sm:$0xff] %v646
    %651 = vst [vmem:[#allocation2 + $0x108] sm:$0xff] %v647
    %652 = vst [vmem:[#allocation2 + $0x110] sm:$0xff] %v648
    %653 = vst [vmem:[#allocation2 + $0x118] sm:$0xff] %v649
    %v654 = vld [vmem:[#allocation3] sm:$0xff]
    %v655 = vld [vmem:[#allocation2] sm:$0xff]
    %v656 = vld [vmem:[#allocation2 + $0x8] sm:$0xff]
    %v657 = vld [vmem:[#allocation2 + $0x10] sm:$0xff]
    %v658 = vld [vmem:[#allocation2 + $0x18] sm:$0xff]
    %v659 = vld [vmem:[#allocation2 + $0x20] sm:$0xff]
    %v660 = vld [vmem:[#allocation2 + $0x28] sm:$0xff]
    %v661 = vld [vmem:[#allocation2 + $0x30] sm:$0xff]
    %v662 = vld [vmem:[#allocation2 + $0x38] sm:$0xff]
    %v663 = vld [vmem:[#allocation2 + $0x40] sm:$0xff]
    %v664 = vld [vmem:[#allocation2 + $0x48] sm:$0xff]
    %v665 = vld [vmem:[#allocation2 + $0x50] sm:$0xff]
    %v666 = vld [vmem:[#allocation2 + $0x58] sm:$0xff]
    %v667 = vld [vmem:[#allocation2 + $0x60] sm:$0xff]
    %v668 = vld [vmem:[#allocation2 + $0x68] sm:$0xff]
    %v669 = vld [vmem:[#allocation2 + $0x70] sm:$0xff]
    %v670 = vld [vmem:[#allocation2 + $0x78] sm:$0xff]
    %v671 = vld [vmem:[#allocation2 + $0x80] sm:$0xff]
    %v672 = vld [vmem:[#allocation2 + $0x88] sm:$0xff]
    %v673 = vld [vmem:[#allocation2 + $0x90] sm:$0xff]
    %v674 = vld [vmem:[#allocation2 + $0x98] sm:$0xff]
    %v675 = vld [vmem:[#allocation2 + $0xa0] sm:$0xff]
    %v676 = vld [vmem:[#allocation2 + $0xa8] sm:$0xff]
    %v677 = vld [vmem:[#allocation2 + $0xb0] sm:$0xff]
    %v678 = vld [vmem:[#allocation2 + $0xb8] sm:$0xff]
    %v679 = vld [vmem:[#allocation2 + $0xc0] sm:$0xff]
    %v680 = vld [vmem:[#allocation2 + $0xc8] sm:$0xff]
    %v681 = vld [vmem:[#allocation2 + $0xd0] sm:$0xff]
    %v682 = vld [vmem:[#allocation2 + $0xd8] sm:$0xff]
    %v683 = vld [vmem:[#allocation2 + $0xe0] sm:$0xff]
    %v684 = vld [vmem:[#allocation2 + $0xe8] sm:$0xff]
    %v685 = vld [vmem:[#allocation2 + $0xf0] sm:$0xff]
    %v686 = vld [vmem:[#allocation2 + $0xf8] sm:$0xff]
    %v687 = vld [vmem:[#allocation2 + $0x100] sm:$0xff]
    %v688 = vld [vmem:[#allocation2 + $0x108] sm:$0xff]
    %v689 = vld [vmem:[#allocation2 + $0x110] sm:$0xff]
    %v690 = vld [vmem:[#allocation2 + $0x118] sm:$0xff]
    %v692 = vunpack.c.l.b16 %v654
    %v693 = vunpack.c.h.b16 %v654
    %v694 = vpack.c.b16 %v692, %v692
    %v695 = vpack.c.b16 %v693, %v693
    %vm697 = vcmask 130048
    %v699 = vsel %vm697, %v695, 0
    %701 = vmatprep.subr.bf16.mxu0 %v656
    %702 = vmatpush1.bf16.msra.mxu0 %v655
    %703 = vmatprep.subr.bf16.mxu0 %v660
    %704 = vmatpush1.bf16.msra.mxu0 %v659
    %705 = vmatprep.subr.bf16.mxu0 %v664
    %706 = vmatpush1.bf16.msra.mxu0 %v663
    %707 = vmatprep.subr.bf16.mxu0 %v668
    %708 = vmatpush1.bf16.msra.mxu0 %v667
    %709 = vmatprep.subr.bf16.mxu0 %v672
    %710 = vmatpush1.bf16.msra.mxu0 %v671
    %711 = vmatprep.subr.bf16.mxu0 %v676
    %712 = vmatpush1.bf16.msra.mxu0 %v675
    %713 = vmatprep.subr.bf16.mxu0 %v680
    %714 = vmatpush1.bf16.msra.mxu0 %v679
    %715 = vmatprep.subr.bf16.mxu0 %v684
    %716 = vmatpush1.bf16.msra.mxu0 %v683
    %717 = vmatprep.subr.bf16.mxu0 %v688
    %718 = vmatpush1.bf16.msra.mxu0 %v687
    %719 = vmatprep.subr.bf16.mxu0 0
    %720 = vmatpush1.bf16.msra.mxu0 0
    %721 = vmatprep.subr.bf16.mxu0 0
    %722 = vmatpush1.bf16.msra.mxu0 0
    %723 = vmatprep.subr.bf16.mxu0 0
    %724 = vmatpush1.bf16.msra.mxu0 0
    %725 = vmatprep.subr.bf16.mxu0 0
    %726 = vmatpush1.bf16.msra.mxu0 0
    %727 = vmatprep.subr.bf16.mxu0 0
    %728 = vmatpush1.bf16.msra.mxu0 0
    %729 = vmatprep.subr.bf16.mxu0 0
    %730 = vmatpush1.bf16.msra.mxu0 0
    %731 = vmatprep.subr.bf16.mxu0 0
    %732 = vmatpush1.bf16.msra.mxu0 0
    %733 = vmatprep.mubr.bf16.mxu0 %v699
    %734 = vmatmul.mubr.bf16.gmra.mrb[0].mxu0 %v694
    %v735 = vpop.f32.mrb[0].mxu0
    %v736 = vadd.f32 0.0, %v735
    %v737 = vpop.f32.mrb[0].mxu0
    %v738 = vadd.f32 0.0, %v737
    %v739 = vpop.f32.mrb[0].mxu0
    %v740 = vpop.f32.mrb[0].mxu0
    %741 = vdwg.mxu0
    %742 = vmatprep.subr.bf16.mxu0 %v658
    %743 = vmatpush1.bf16.msra.mxu0 %v657
    %744 = vmatprep.subr.bf16.mxu0 %v662
    %745 = vmatpush1.bf16.msra.mxu0 %v661
    %746 = vmatprep.subr.bf16.mxu0 %v666
    %747 = vmatpush1.bf16.msra.mxu0 %v665
    %748 = vmatprep.subr.bf16.mxu0 %v670
    %749 = vmatpush1.bf16.msra.mxu0 %v669
    %750 = vmatprep.subr.bf16.mxu0 %v674
    %751 = vmatpush1.bf16.msra.mxu0 %v673
    %752 = vmatprep.subr.bf16.mxu0 %v678
    %753 = vmatpush1.bf16.msra.mxu0 %v677
    %754 = vmatprep.subr.bf16.mxu0 %v682
    %755 = vmatpush1.bf16.msra.mxu0 %v681
    %756 = vmatprep.subr.bf16.mxu0 %v686
    %757 = vmatpush1.bf16.msra.mxu0 %v685
    %758 = vmatprep.subr.bf16.mxu0 %v690
    %759 = vmatpush1.bf16.msra.mxu0 %v689
    %760 = vmatprep.subr.bf16.mxu0 0
    %761 = vmatpush1.bf16.msra.mxu0 0
    %762 = vmatprep.subr.bf16.mxu0 0
    %763 = vmatpush1.bf16.msra.mxu0 0
    %764 = vmatprep.subr.bf16.mxu0 0
    %765 = vmatpush1.bf16.msra.mxu0 0
    %766 = vmatprep.subr.bf16.mxu0 0
    %767 = vmatpush1.bf16.msra.mxu0 0
    %768 = vmatprep.subr.bf16.mxu0 0
    %769 = vmatpush1.bf16.msra.mxu0 0
    %770 = vmatprep.subr.bf16.mxu0 0
    %771 = vmatpush1.bf16.msra.mxu0 0
    %772 = vmatprep.subr.bf16.mxu0 0
    %773 = vmatpush1.bf16.msra.mxu0 0
    %774 = vmatprep.mubr.bf16.mxu0 %v699
    %775 = vmatmul.mubr.bf16.gmra.mrb[0].mxu0 %v694
    %v776 = vpop.f32.mrb[0].mxu0
    %v777 = vadd.f32 0.0, %v776
    %v778 = vpop.f32.mrb[0].mxu0
    %v779 = vadd.f32 0.0, %v778
    %v780 = vpop.f32.mrb[0].mxu0
    %v781 = vpop.f32.mrb[0].mxu0
    %782 = vdwg.mxu0
    %v783 = vadd.f32 %v736, %v738
    %v784 = vadd.f32 %v783, %v777
    %v785 = vadd.f32 %v784, %v779
    %786 = vadd.xlane.f32.xlu0 %v785
    %v787 = vpop.xlane.xlu0 %786
    %v788 = vmul.f32 %v787, 0.001953125
    %v789 = vsub.f32 %v736, %v788
    %v790 = vsub.f32 %v738, %v788
    %v791 = vsub.f32 %v777, %v788
    %v792 = vsub.f32 %v779, %v788
    %v793 = vmul.f32 %v789, %v789
    %v794 = vmul.f32 %v790, %v790
    %v795 = vmul.f32 %v791, %v791
    %v796 = vmul.f32 %v792, %v792
    %v797 = vadd.f32 %v793, %v794
    %v798 = vadd.f32 %v797, %v795
    %v799 = vadd.f32 %v798, %v796
    %800 = vadd.xlane.f32.xlu0 %v799
    %v801 = vpop.xlane.xlu0 %800
    %v802 = vmul.f32 %v801, 0.001953125
    %v803 = vld [vmem:[%s3] sm:$0xff]
    %v804 = vadd.f32 %v802, 1e-05
    %v805 = vrsqrt.pop %v804
    %v806 = vmul.f32 %v803, %v805
    %808 = vset.pattern.permute.xlu0 0
    %809 = vperm.xlu0 %808, %v806
    %v810 = vpop.permute.xlu0 %809
    %v812 = vmul.f32 %v789, %v810
    %v813 = vmul.f32 %v790, %v810
    %v814 = vmul.f32 %v791, %v810
    %v815 = vmul.f32 %v792, %v810
    %v816 = vld [vmem:[%s4] sm:$0xff]
    %818 = vset.pattern.permute.xlu0 0
    %819 = vperm.xlu0 %818, %v816
    %v820 = vpop.permute.xlu0 %819
    %v822 = vadd.f32 %v812, %v820
    %v823 = vadd.f32 %v813, %v820
    %v824 = vadd.f32 %v814, %v820
    %v825 = vadd.f32 %v815, %v820
    %826 = vst [vmem:[#allocation6] sm:$0xff] %v822
    %827 = vst [vmem:[#allocation6 + $0x8] sm:$0xff] %v823
    %828 = vst [vmem:[#allocation6 + $0x10] sm:$0xff] %v824
    %829 = vst [vmem:[#allocation6 + $0x18] sm:$0xff] %v825
    // Predicated region
    $region26: #{tpu_custom_call.1} parent=1 // pred_check
      _
    $region27: #{tpu_custom_call.1} parent=1 // pred_check_branch
      %831 = sbr.rel (0) target = $region29
    $region28: #{tpu_custom_call.1} parent=1 // pred_region
      %s833 = ssub.s32 512, 512
      %834 = vsyncadd [#allocation5], %s833
      %s836 = sshll.u32 [#allocation6], 4
      %s837 = int_to_ptr.vmem [resolvable:$true] %s836
      %839 = dma.vmem_to_hbm [thread:$0]  %s837, 512, %s5, [#allocation5]
    $region29: #{tpu_custom_call.1} parent=1 // pred_fallthru
      _
    // Predicated region
    $region30: #{tpu_custom_call.1} parent=1 // pred_check
      _
    $region31: #{tpu_custom_call.1} parent=1 // pred_check_branch
      %841 = sbr.rel (0) target = $region33
    $region32: #{tpu_custom_call.1} parent=1 // pred_region
      %842 = dma.done [#allocation5], 512
    $region33: #{tpu_custom_call.1} parent=1 // pred_fallthru
      _
    %843 = vsyncpa [#allocation4], 1
    %844 = vsyncpa [#allocation5], 1

</llo_original>
